<compile_context>
chip_gen: v7x
topology: tpu7x:2x2x1
jax: 0.10.0
libtpu: 0.0.40
codegen_flags: <defaults>
</compile_context>

<pallas_src>
import math

import jax
import jax.numpy as jnp
from jax.experimental import pallas as pl
from jax.experimental.pallas import tpu as pltpu


def _round_up(x, m):
    return (x + m - 1) // m * m


def _mlp_kernel(x_ref, w1_ref, b1_ref, w2_ref, b2_ref, wo_ref, bo_ref, o_ref):
    """One batch tile.

    x_ref : (TM, E)  natural-layout input tile (batch on sublanes)
    w1_ref: (H, E)   BN1-folded weight,  b1_ref: (H, 1) folded bias
    w2_ref: (H, H)   BN2-folded weight,  b2_ref: (H, 1) folded bias
    wo_ref: (H, 1)   output projection,  bo_ref: (1, 1)
    o_ref : (1, TM)  lane-dense output tile (batch on lanes)
    """
    x = x_ref[...].astype(jnp.float32)

    # Layer 1: (H,E) @ (E,TM).  The x.T is folded into the MXU dimension
    # numbers (same pattern as q @ k.T) -- no separate transpose pass.
    h1 = jnp.dot(w1_ref[...], x.T, preferred_element_type=jnp.float32) + b1_ref[...]
    h1 = jnp.maximum(h1, 0.0)

    # Layer 2: (H,H) @ (H,TM) on the MXU, folded-BN bias, ReLU.
    h2 = jnp.dot(w2_ref[...], h1, preferred_element_type=jnp.float32) + b2_ref[...]
    h2 = jnp.maximum(h2, 0.0)

    # Output head: VPU multiply + XLU sublane reduction -> lane-dense (1,TM) row.
    out = jnp.sum(h2 * wo_ref[...], axis=0, keepdims=True) + bo_ref[...]
    o_ref[...] = jax.nn.sigmoid(out).astype(o_ref.dtype)


def _vmem_limit_bytes(bm, E, H):
    """Scoped-VMEM request with (8,128) tile padding + temporaries + headroom."""
    pad = lambda r, c: _round_up(r, 8) * _round_up(c, 128) * 4  # f32 VMEM tile
    x_buf = pad(bm, E)            # lane-padded x tile (E -> 128 lanes)
    out_buf = pad(1, bm)
    w_bufs = pad(H, E) + pad(H, H) + 3 * pad(H, 1) + pad(1, 1)
    temps = 4 * pad(H, bm)        # h1 / h2 / head temporaries / matmul staging
    need = 2 * (x_buf + out_buf + w_bufs) + temps   # 2x: double-buffered pipeline
    limit = int(1.5 * need) + (4 << 20)
    return min(max(limit, 16 << 20), 48 << 20)


def simple_bilinear_forward(x, kparams, *, tm=8192):
    """x: (N, embed_dim).  kparams: folded params (see fold_params).
    Returns (N, 1) float32 (eval-mode semantics)."""
    N, E = x.shape
    H = kparams["w1"].shape[0]

    # Lane-dense batch tile: multiple of 128.  If the whole batch fits in one
    # tile, use the exact array extent (always a legal block shape); otherwise
    # tile with tm and let Pallas mask the partial last block -- no host pad.
    tm = _round_up(max(tm, 128), 128)
    if N <= tm:
        bm, grid_n = N, 1
    else:
        bm, grid_n = tm, pl.cdiv(N, tm)

    const = lambda shape: pl.BlockSpec(shape, lambda i: (0, 0))

    out = pl.pallas_call(
        _mlp_kernel,
        out_shape=jax.ShapeDtypeStruct((1, N), jnp.float32),
        grid=(grid_n,),
        in_specs=[
            pl.BlockSpec((bm, E), lambda i: (i, 0)),   # x tile, natural layout
            const((H, E)),                             # w1 (BN-folded), VMEM-resident
            const((H, 1)),                             # b1 (folded)
            const((H, H)),                             # w2 (BN-folded)
            const((H, 1)),                             # b2 (folded)
            const((H, 1)),                             # wo (column)
            const((1, 1)),                             # bo
        ],
        out_specs=pl.BlockSpec((1, bm), lambda i: (0, i)),
        compiler_params=pltpu.CompilerParams(
            dimension_semantics=("parallel",),
            vmem_limit_bytes=_vmem_limit_bytes(bm, E, H),
        ),
        cost_estimate=pl.CostEstimate(
            flops=int(2 * N * (E * H + H * H + H)),
            transcendentals=int(N),
            bytes_accessed=int(4 * (N * E + N + H * E + H * H + 3 * H + 1)),
        ),
    )(
        x,
        kparams["w1"], kparams["b1"],
        kparams["w2"], kparams["b2"],
        kparams["wo"], kparams["bo"],
    )

    return out.reshape(N, 1)


# -------------------- parameter construction / folding --------------------

def init_raw_params(key, embed_dim, hid_dim):
    """PyTorch-style params: Linear weights stored (out_features, in_features)."""
    ks = jax.random.split(key, 12)

    def linear_init(kw, kb, fan_in, fan_out):
        bound = 1.0 / math.sqrt(fan_in)
        w = jax.random.uniform(kw, (fan_out, fan_in), jnp.float32, -bound, bound)
        b = jax.random.uniform(kb, (fan_out,), jnp.float32, -bound, bound)
        return w, b

    w1, b1 = linear_init(ks[0], ks[1], embed_dim, hid_dim)
    w2, b2 = linear_init(ks[2], ks[3], hid_dim, hid_dim)
    wo, bo = linear_init(ks[4], ks[5], hid_dim, 1)

    # Non-trivial BN params so the folding path is actually exercised in the
    # test (PyTorch defaults would be gamma=1, beta=0, mean=0, var=1).
    def bn_params(kg, kb2, km, d):
        return dict(
            gamma=1.0 + 0.1 * jax.random.normal(kg, (d,), jnp.float32),
            beta=0.1 * jax.random.normal(kb2, (d,), jnp.float32),
            mean=0.1 * jax.random.normal(km, (d,), jnp.float32),
            var=jnp.ones((d,), jnp.float32) * 0.9,
        )

    bn1 = bn_params(ks[6], ks[7], ks[8], hid_dim)
    bn2 = bn_params(ks[9], ks[10], ks[11], hid_dim)
    return dict(w1=w1, b1=b1, bn1=bn1, w2=w2, b2=b2, bn2=bn2, wo=wo, bo=bo)


def fold_params(raw, eps=1e-5):
    """Fold eval-mode BatchNorm1d + linear bias into the weights (host-side)."""
    def fold(w, b, bn):
        scale = bn["gamma"] / jnp.sqrt(bn["var"] + eps)        # (H,)
        shift = bn["beta"] - bn["mean"] * scale                # (H,)
        return w * scale[:, None], (b * scale + shift)[:, None]

    w1, b1 = fold(raw["w1"], raw["b1"], raw["bn1"])
    w2, b2 = fold(raw["w2"], raw["b2"], raw["bn2"])
    return dict(
        w1=w1, b1=b1, w2=w2, b2=b2,
        wo=raw["wo"].T,                 # (H, 1) column for the reduction head
        bo=raw["bo"].reshape(1, 1),
    )


def reference_forward(x, raw, eps=1e-5):
    """Pure-JAX reference, PyTorch eval-mode semantics (dropout = identity)."""
    def bn(h, p):
        return (h - p["mean"]) / jnp.sqrt(p["var"] + eps) * p["gamma"] + p["beta"]

    h1 = jnp.maximum(bn(x @ raw["w1"].T + raw["b1"], raw["bn1"]), 0.0)
    h2 = jnp.maximum(bn(h1 @ raw["w2"].T + raw["b2"], raw["bn2"]), 0.0)
    return jax.nn.sigmoid(h2 @ raw["wo"].T + raw["bo"])


if __name__ == "__main__":
    embed_dim = 32
    hid_dim = 32
    batch = 8

    key = jax.random.PRNGKey(0)
    k_x, k_p = jax.random.split(key)
    x = jax.random.normal(k_x, (batch, embed_dim), jnp.float32)

    raw = init_raw_params(k_p, embed_dim, hid_dim)
    kparams = fold_params(raw)

    out = simple_bilinear_forward(x, kparams)
    out = jax.block_until_ready(out)

    expected = reference_forward(x, raw)
    assert out.shape == (batch, 1)
    assert jnp.allclose(out, expected, atol=1e-5, rtol=1e-5), (
        f"max abs err {jnp.max(jnp.abs(out - expected))}")

    print("KERNEL_OK")
</pallas_src>

<mosaic_0001>
module attributes {stable_mosaic.version = 11 : i64} {
  func.func @_mlp_kernel(%arg0: i32, %arg1: memref<8x32xf32, #tpu.memory_space<vmem>>, %arg2: memref<32x32xf32, #tpu.memory_space<vmem>>, %arg3: memref<32x1xf32, #tpu.memory_space<vmem>>, %arg4: memref<32x32xf32, #tpu.memory_space<vmem>>, %arg5: memref<32x1xf32, #tpu.memory_space<vmem>>, %arg6: memref<32x1xf32, #tpu.memory_space<vmem>>, %arg7: memref<1x1xf32, #tpu.memory_space<vmem>>, %arg8: memref<1x8xf32, #tpu.memory_space<vmem>>) attributes {dimension_semantics = [#tpu.dimension_semantics<parallel>], iteration_bounds = array<i64: 1>, scalar_prefetch = 0 : i64, scratch_operands = 0 : i64, tpu.core_type = #tpu.core_type<tc>, window_params = [{transform_indices = @transform_0, window_bounds = array<i64: 8, 32>}, {pipeline_mode = #tpu.pipeline_mode<synchronous>, transform_indices = @transform_1, window_bounds = array<i64: 32, 32>}, {pipeline_mode = #tpu.pipeline_mode<synchronous>, transform_indices = @transform_2, window_bounds = array<i64: 32, 1>}, {pipeline_mode = #tpu.pipeline_mode<synchronous>, transform_indices = @transform_3, window_bounds = array<i64: 32, 32>}, {pipeline_mode = #tpu.pipeline_mode<synchronous>, transform_indices = @transform_4, window_bounds = array<i64: 32, 1>}, {pipeline_mode = #tpu.pipeline_mode<synchronous>, transform_indices = @transform_5, window_bounds = array<i64: 32, 1>}, {pipeline_mode = #tpu.pipeline_mode<synchronous>, transform_indices = @transform_6, window_bounds = array<i64: 1, 1>}, {transform_indices = @transform_7, window_bounds = array<i64: 1, 8>}]} {
    %c0 = arith.constant 0 : index
    %c0_0 = arith.constant 0 : index
    %0 = vector.load %arg1[%c0, %c0_0] : memref<8x32xf32, #tpu.memory_space<vmem>>, vector<8x32xf32>
    %c0_1 = arith.constant 0 : index
    %c0_2 = arith.constant 0 : index
    %1 = vector.load %arg2[%c0_1, %c0_2] : memref<32x32xf32, #tpu.memory_space<vmem>>, vector<32x32xf32>
    %2 = tpu.transpose %0, [1, 0] : vector<8x32xf32> -> vector<32x8xf32>
    %cst = arith.constant dense<0.000000e+00> : vector<32x8xf32>
    %3 = tpu.matmul %1, %2, %cst {dimension_numbers = #tpu.dot_dimension_numbers<[1], [0], [0], [1], [0, 0, 1, 1], [], []>} : vector<32x32xf32>, vector<32x8xf32>, vector<32x8xf32> -> vector<32x8xf32>
    %c0_3 = arith.constant 0 : index
    %c0_4 = arith.constant 0 : index
    %4 = vector.load %arg3[%c0_3, %c0_4] : memref<32x1xf32, #tpu.memory_space<vmem>>, vector<32x1xf32>
    %5 = vector.broadcast %4 : vector<32x1xf32> to vector<32x8xf32>
    %6 = arith.addf %3, %5 : vector<32x8xf32>
    %cst_5 = arith.constant 0.000000e+00 : f32
    %7 = vector.broadcast %cst_5 : f32 to vector<32x8xf32>
    %8 = arith.maximumf %6, %7 : vector<32x8xf32>
    %c0_6 = arith.constant 0 : index
    %c0_7 = arith.constant 0 : index
    %9 = vector.load %arg4[%c0_6, %c0_7] : memref<32x32xf32, #tpu.memory_space<vmem>>, vector<32x32xf32>
    %cst_8 = arith.constant dense<0.000000e+00> : vector<32x8xf32>
    %10 = tpu.matmul %9, %8, %cst_8 {dimension_numbers = #tpu.dot_dimension_numbers<[1], [0], [0], [1], [0, 0, 1, 1], [], []>} : vector<32x32xf32>, vector<32x8xf32>, vector<32x8xf32> -> vector<32x8xf32>
    %c0_9 = arith.constant 0 : index
    %c0_10 = arith.constant 0 : index
    %11 = vector.load %arg5[%c0_9, %c0_10] : memref<32x1xf32, #tpu.memory_space<vmem>>, vector<32x1xf32>
    %12 = vector.broadcast %11 : vector<32x1xf32> to vector<32x8xf32>
    %13 = arith.addf %10, %12 : vector<32x8xf32>
    %cst_11 = arith.constant 0.000000e+00 : f32
    %14 = vector.broadcast %cst_11 : f32 to vector<32x8xf32>
    %15 = arith.maximumf %13, %14 : vector<32x8xf32>
    %c0_12 = arith.constant 0 : index
    %c0_13 = arith.constant 0 : index
    %16 = vector.load %arg6[%c0_12, %c0_13] : memref<32x1xf32, #tpu.memory_space<vmem>>, vector<32x1xf32>
    %17 = vector.broadcast %16 : vector<32x1xf32> to vector<32x8xf32>
    %18 = arith.mulf %15, %17 : vector<32x8xf32>
    %cst_14 = arith.constant dense<0.000000e+00> : vector<8xf32>
    %19 = vector.multi_reduction <add>, %18, %cst_14 [0] : vector<32x8xf32> to vector<8xf32>
    %20 = vector.shape_cast %19 : vector<8xf32> to vector<1x8xf32>
    %c0_15 = arith.constant 0 : index
    %c0_16 = arith.constant 0 : index
    %21 = vector.load %arg7[%c0_15, %c0_16] : memref<1x1xf32, #tpu.memory_space<vmem>>, vector<1x1xf32>
    %22 = vector.broadcast %21 : vector<1x1xf32> to vector<1x8xf32>
    %23 = arith.addf %20, %22 : vector<1x8xf32>
    %24 = arith.negf %23 : vector<1x8xf32>
    %25 = math.exp %24 : vector<1x8xf32>
    %cst_17 = arith.constant 1.000000e+00 : f32
    %26 = vector.broadcast %cst_17 : f32 to vector<1x8xf32>
    %27 = arith.addf %26, %25 : vector<1x8xf32>
    %28 = arith.divf %26, %27 : vector<1x8xf32>
    %c0_18 = arith.constant 0 : index
    %c0_19 = arith.constant 0 : index
    %29 = vector.load %arg8[%c0_18, %c0_19] : memref<1x8xf32, #tpu.memory_space<vmem>>, vector<1x8xf32>
    tpu.vector_store %arg8[%c0_18, %c0_19], %28 {strides = array<i32>} : memref<1x8xf32, #tpu.memory_space<vmem>>, vector<1x8xf32>,
    return
  }
  func.func @transform_0(%arg0: i32) -> (i32, i32) {
    %c0_i32 = arith.constant 0 : i32
    %c0_i32_0 = arith.constant 0 : i32
    return %arg0, %c0_i32 : i32, i32
  }
  func.func @transform_1(%arg0: i32) -> (i32, i32) {
    %c0_i32 = arith.constant 0 : i32
    %c0_i32_0 = arith.constant 0 : i32
    %c0_i32_1 = arith.constant 0 : i32
    return %c0_i32, %c0_i32_0 : i32, i32
  }
  func.func @transform_2(%arg0: i32) -> (i32, i32) {
    %c0_i32 = arith.constant 0 : i32
    %c0_i32_0 = arith.constant 0 : i32
    %c0_i32_1 = arith.constant 0 : i32
    return %c0_i32, %c0_i32_0 : i32, i32
  }
  func.func @transform_3(%arg0: i32) -> (i32, i32) {
    %c0_i32 = arith.constant 0 : i32
    %c0_i32_0 = arith.constant 0 : i32
    %c0_i32_1 = arith.constant 0 : i32
    return %c0_i32, %c0_i32_0 : i32, i32
  }
  func.func @transform_4(%arg0: i32) -> (i32, i32) {
    %c0_i32 = arith.constant 0 : i32
    %c0_i32_0 = arith.constant 0 : i32
    %c0_i32_1 = arith.constant 0 : i32
    return %c0_i32, %c0_i32_0 : i32, i32
  }
  func.func @transform_5(%arg0: i32) -> (i32, i32) {
    %c0_i32 = arith.constant 0 : i32
    %c0_i32_0 = arith.constant 0 : i32
    %c0_i32_1 = arith.constant 0 : i32
    return %c0_i32, %c0_i32_0 : i32, i32
  }
  func.func @transform_6(%arg0: i32) -> (i32, i32) {
    %c0_i32 = arith.constant 0 : i32
    %c0_i32_0 = arith.constant 0 : i32
    %c0_i32_1 = arith.constant 0 : i32
    return %c0_i32, %c0_i32_0 : i32, i32
  }
  func.func @transform_7(%arg0: i32) -> (i32, i32) {
    %c0_i32 = arith.constant 0 : i32
    %c0_i32_0 = arith.constant 0 : i32
    return %c0_i32, %arg0 : i32, i32
  }
}

</mosaic_0001>

<llo_original>
// kernel: tpu_custom_call.1
$region0: #{tpu_custom_call.1}
  #allocation0 [shape = 'u32[]', space=smem, size = 0x4, offset = 0x4, fixed_abs, tag = 'smem constant byte address 0x4 - core index']
  #allocation1 [shape = 'u32[144,128]{1,0:T(1,128)}', space=vmem, size = 0x12000, scoped, tag = 'internal scratch']
  #allocation2 [shape = 'f32[1,1]{1,0:T(1,128)S(1)}', space=vmem, size = 0x200, scoped, tag = 'scoped memory for tpu_custom_call.1']
  %s0 = inlined_call_operand.vmem [shape: f32[8,32], index: 0, kind: input, shape index: {}]
  %s1 = inlined_call_operand.vmem [shape: f32[32,32], index: 1, kind: input, shape index: {}]
  %s2 = inlined_call_operand.vmem [shape: f32[32,1], index: 2, kind: input, shape index: {}]
  %s3 = inlined_call_operand.vmem [shape: f32[32,32], index: 3, kind: input, shape index: {}]
  %s4 = inlined_call_operand.vmem [shape: f32[32,1], index: 4, kind: input, shape index: {}]
  %s5 = inlined_call_operand.vmem [shape: f32[32,1], index: 5, kind: input, shape index: {}]
  %s6 = inlined_call_operand.<no memory space> [shape: f32[1,1], index: 6, kind: input, shape index: {}]
  %s7 = inlined_call_operand.hbm [shape: f32[1,8], index: 7, kind: output, shape index: {}]
  %s8 = sld [smem:[#allocation0]]
  $region38: #{tpu_custom_call.1} parent=0
    _
  %s10 = ssub.s32 1, %s8
  %s11 = scalar_select 0, %s10, %s8
  %v12 = vstv %s6
  %13 = vst [vmem:[#allocation2] sm:$0x1] %v12
  $region1: #{tpu_custom_call.1} parent=0
    #allocation3 [shape = 'u8[512]{0}', space=vmem, size = 0x400, scoped, tag = 'output window, operand 0, single buffered']
    #allocation4 [shape = 's32[1]{0}', space=sflag, size = 0x4, scoped, tag = 'scoped memory for tpu_custom_call.1']
    %14 = vsyncpa [#allocation4], 0
    // Predicated region
    $region2: #{tpu_custom_call.1} parent=1 // pred_check
      _
    $region3: #{tpu_custom_call.1} parent=1 // pred_check_branch
      %16 = sbr.rel (0) target = $region5
    $region4: #{tpu_custom_call.1} parent=1 // pred_region
      _
    $region5: #{tpu_custom_call.1} parent=1 // pred_fallthru
      _
    // Predicated region
    $region6: #{tpu_custom_call.1} parent=1 // pred_check
      _
    $region7: #{tpu_custom_call.1} parent=1 // pred_check_branch
      %18 = sbr.rel (0) target = $region9
    $region8: #{tpu_custom_call.1} parent=1 // pred_region
      _
    $region9: #{tpu_custom_call.1} parent=1 // pred_fallthru
      _
    // Predicated region
    $region10: #{tpu_custom_call.1} parent=1 // pred_check
      _
    $region11: #{tpu_custom_call.1} parent=1 // pred_check_branch
      %20 = sbr.rel (0) target = $region13
    $region12: #{tpu_custom_call.1} parent=1 // pred_region
      _
    $region13: #{tpu_custom_call.1} parent=1 // pred_fallthru
      _
    // Predicated region
    $region14: #{tpu_custom_call.1} parent=1 // pred_check
      _
    $region15: #{tpu_custom_call.1} parent=1 // pred_check_branch
      %22 = sbr.rel (0) target = $region17
    $region16: #{tpu_custom_call.1} parent=1 // pred_region
      _
    $region17: #{tpu_custom_call.1} parent=1 // pred_fallthru
      _
    // Predicated region
    $region18: #{tpu_custom_call.1} parent=1 // pred_check
      _
    $region19: #{tpu_custom_call.1} parent=1 // pred_check_branch
      %24 = sbr.rel (0) target = $region21
    $region20: #{tpu_custom_call.1} parent=1 // pred_region
      _
    $region21: #{tpu_custom_call.1} parent=1 // pred_fallthru
      _
    // Predicated region
    $region22: #{tpu_custom_call.1} parent=1 // pred_check
      _
    $region23: #{tpu_custom_call.1} parent=1 // pred_check_branch
      %26 = sbr.rel (0) target = $region25
    $region24: #{tpu_custom_call.1} parent=1 // pred_region
      _
    $region25: #{tpu_custom_call.1} parent=1 // pred_fallthru
      _
    // Predicated region
    $region26: #{tpu_custom_call.1} parent=1 // pred_check
      _
    $region27: #{tpu_custom_call.1} parent=1 // pred_check_branch
      %28 = sbr.rel (0) target = $region29
    $region28: #{tpu_custom_call.1} parent=1 // pred_region
      _
    $region29: #{tpu_custom_call.1} parent=1 // pred_fallthru
      _
    %v29 = vld [vmem:[%s0] sm:$0xff]
    %v30 = vld [vmem:[%s1] sm:$0xff]
    %v31 = vld [vmem:[%s1 + $0x8] sm:$0xff]
    %v32 = vld [vmem:[%s1 + $0x10] sm:$0xff]
    %v33 = vld [vmem:[%s1 + $0x18] sm:$0xff]
    %v34 = vld [vmem:[%s2] sm:$0xff]
    %v35 = vld [vmem:[%s2 + $0x8] sm:$0xff]
    %v36 = vld [vmem:[%s2 + $0x10] sm:$0xff]
    %v37 = vld [vmem:[%s2 + $0x18] sm:$0xff]
    %39 = vset.pattern.permute.xlu0 0
    %40 = vperm.xlu0 %39, %v34
    %v41 = vpop.permute.xlu0 %40
    %44 = vset.pattern.permute.xlu0 0
    %45 = vperm.xlu0 %44, %v35
    %v46 = vpop.permute.xlu0 %45
    %49 = vset.pattern.permute.xlu0 0
    %50 = vperm.xlu0 %49, %v36
    %v51 = vpop.permute.xlu0 %50
    %54 = vset.pattern.permute.xlu0 0
    %55 = vperm.xlu0 %54, %v37
    %v56 = vpop.permute.xlu0 %55
    %vm58 = vcmask 261120
    %v60 = vsel %vm58, %v30, 0
    %v63 = vsel %vm58, %v31, 0
    %v66 = vsel %vm58, %v32, 0
    %v69 = vsel %vm58, %v33, 0
    %v72 = vsel %vm58, %v29, 0
    %74 = vmatprep.subr.mxu0 0.0
    %75 = vmatpush1.xpose.msra.mxu0 %v72
    %76 = vmatprep.subr.mxu0 0.0
    %77 = vmatpush1.xpose.msra.mxu0 0.0
    %78 = vmatprep.subr.mxu0 0.0
    %79 = vmatpush1.xpose.msra.mxu0 0.0
    %80 = vmatprep.subr.mxu0 0.0
    %81 = vmatpush1.xpose.msra.mxu0 0.0
    %82 = vmatprep.subr.mxu0 0.0
    %83 = vmatpush1.xpose.msra.mxu0 0.0
    %84 = vmatprep.subr.mxu0 0.0
    %85 = vmatpush1.xpose.msra.mxu0 0.0
    %86 = vmatprep.subr.mxu0 0.0
    %87 = vmatpush1.xpose.msra.mxu0 0.0
    %88 = vmatprep.subr.mxu0 0.0
    %89 = vmatpush1.xpose.msra.mxu0 0.0
    %90 = vmatprep.subr.mxu0 0.0
    %91 = vmatpush1.xpose.msra.mxu0 0.0
    %92 = vmatprep.subr.mxu0 0.0
    %93 = vmatpush1.xpose.msra.mxu0 0.0
    %94 = vmatprep.subr.mxu0 0.0
    %95 = vmatpush1.xpose.msra.mxu0 0.0
    %96 = vmatprep.subr.mxu0 0.0
    %97 = vmatpush1.xpose.msra.mxu0 0.0
    %98 = vmatprep.subr.mxu0 0.0
    %99 = vmatpush1.xpose.msra.mxu0 0.0
    %100 = vmatprep.subr.mxu0 0.0
    %101 = vmatpush1.xpose.msra.mxu0 0.0
    %102 = vmatprep.subr.mxu0 0.0
    %103 = vmatpush1.xpose.msra.mxu0 0.0
    %104 = vmatprep.subr.mxu0 0.0
    %105 = vmatpush1.xpose.msra.mxu0 0.0
    %106 = vmatprep.subr.mxu0 0.0
    %107 = vmatpush1.xpose.msra.mxu0 0.0
    %108 = vmatprep.subr.mxu0 0.0
    %109 = vmatpush1.xpose.msra.mxu0 0.0
    %110 = vmatprep.subr.mxu0 0.0
    %111 = vmatpush1.xpose.msra.mxu0 0.0
    %112 = vmatprep.subr.mxu0 0.0
    %113 = vmatpush1.xpose.msra.mxu0 0.0
    %114 = vmatprep.subr.mxu0 0.0
    %115 = vmatpush1.xpose.msra.mxu0 0.0
    %116 = vmatprep.subr.mxu0 0.0
    %117 = vmatpush1.xpose.msra.mxu0 0.0
    %118 = vmatprep.subr.mxu0 0.0
    %119 = vmatpush1.xpose.msra.mxu0 0.0
    %120 = vmatprep.subr.mxu0 0.0
    %121 = vmatpush1.xpose.msra.mxu0 0.0
    %122 = vmatprep.subr.mxu0 0.0
    %123 = vmatpush1.xpose.msra.mxu0 0.0
    %124 = vmatprep.subr.mxu0 0.0
    %125 = vmatpush1.xpose.msra.mxu0 0.0
    %126 = vmatprep.subr.mxu0 0.0
    %127 = vmatpush1.xpose.msra.mxu0 0.0
    %128 = vmatprep.subr.mxu0 0.0
    %129 = vmatpush1.xpose.msra.mxu0 0.0
    %130 = vmatprep.subr.mxu0 0.0
    %131 = vmatpush1.xpose.msra.mxu0 0.0
    %132 = vmatprep.subr.mxu0 0.0
    %133 = vmatpush1.xpose.msra.mxu0 0.0
    %134 = vmatprep.subr.mxu0 0.0
    %135 = vmatpush1.xpose.msra.mxu0 0.0
    %136 = vmatprep.subr.mxu0 0.0
    %137 = vmatpush1.xpose.msra.mxu0 0.0
    %138 = vmatprep.mubr.f32.mxu0 0.0
    %139 = vmatmul.mubr.f32.gmra.mrb[0].mxu0 %v60
    %v140 = vpop.f32.mrb[0].mxu0
    %v141 = vadd.f32 %v41, %v140
    %v142 = vpop.f32.mrb[0].mxu0
    %143 = vmatprep.mubr.f32.mxu0 0.0
    %144 = vmatmul.mubr.f32.gmra.mrb[0].mxu0 %v63
    %v145 = vpop.f32.mrb[0].mxu0
    %v146 = vadd.f32 %v46, %v145
    %v147 = vpop.f32.mrb[0].mxu0
    %148 = vmatprep.mubr.f32.mxu0 0.0
    %149 = vmatmul.mubr.f32.gmra.mrb[0].mxu0 %v66
    %v150 = vpop.f32.mrb[0].mxu0
    %v151 = vadd.f32 %v51, %v150
    %v152 = vpop.f32.mrb[0].mxu0
    %153 = vmatprep.mubr.f32.mxu0 0.0
    %154 = vmatmul.mubr.f32.gmra.mrb[0].mxu0 %v69
    %v155 = vpop.f32.mrb[0].mxu0
    %v156 = vadd.f32 %v56, %v155
    %v157 = vpop.f32.mrb[0].mxu0
    %158 = vdwg.mxu0
    %v159 = vmax.f32 %v141, 0.0
    %v160 = vmax.f32 %v146, 0.0
    %v161 = vmax.f32 %v151, 0.0
    %v162 = vmax.f32 %v156, 0.0
    %v163 = vld [vmem:[%s3] sm:$0xff]
    %v164 = vld [vmem:[%s3 + $0x8] sm:$0xff]
    %v165 = vld [vmem:[%s3 + $0x10] sm:$0xff]
    %v166 = vld [vmem:[%s3 + $0x18] sm:$0xff]
    %v167 = vld [vmem:[%s4] sm:$0xff]
    %v168 = vld [vmem:[%s4 + $0x8] sm:$0xff]
    %v169 = vld [vmem:[%s4 + $0x10] sm:$0xff]
    %v170 = vld [vmem:[%s4 + $0x18] sm:$0xff]
    %172 = vset.pattern.permute.xlu0 0
    %173 = vperm.xlu0 %172, %v167
    %v174 = vpop.permute.xlu0 %173
    %177 = vset.pattern.permute.xlu0 0
    %178 = vperm.xlu0 %177, %v168
    %v179 = vpop.permute.xlu0 %178
    %182 = vset.pattern.permute.xlu0 0
    %183 = vperm.xlu0 %182, %v169
    %v184 = vpop.permute.xlu0 %183
    %187 = vset.pattern.permute.xlu0 0
    %188 = vperm.xlu0 %187, %v170
    %v189 = vpop.permute.xlu0 %188
    %v192 = vsel %vm58, %v163, 0
    %v195 = vsel %vm58, %v164, 0
    %v198 = vsel %vm58, %v165, 0
    %v201 = vsel %vm58, %v166, 0
    %203 = vmatprep.subr.mxu0 0.0
    %204 = vmatpush1.msra.mxu0 %v159
    %205 = vmatprep.subr.mxu0 0.0
    %206 = vmatpush1.msra.mxu0 %v160
    %207 = vmatprep.subr.mxu0 0.0
    %208 = vmatpush1.msra.mxu0 %v161
    %209 = vmatprep.subr.mxu0 0.0
    %210 = vmatpush1.msra.mxu0 %v162
    %211 = vmatprep.subr.mxu0 0.0
    %212 = vmatpush1.msra.mxu0 0.0
    %213 = vmatprep.subr.mxu0 0.0
    %214 = vmatpush1.msra.mxu0 0.0
    %215 = vmatprep.subr.mxu0 0.0
    %216 = vmatpush1.msra.mxu0 0.0
    %217 = vmatprep.subr.mxu0 0.0
    %218 = vmatpush1.msra.mxu0 0.0
    %219 = vmatprep.subr.mxu0 0.0
    %220 = vmatpush1.msra.mxu0 0.0
    %221 = vmatprep.subr.mxu0 0.0
    %222 = vmatpush1.msra.mxu0 0.0
    %223 = vmatprep.subr.mxu0 0.0
    %224 = vmatpush1.msra.mxu0 0.0
    %225 = vmatprep.subr.mxu0 0.0
    %226 = vmatpush1.msra.mxu0 0.0
    %227 = vmatprep.subr.mxu0 0.0
    %228 = vmatpush1.msra.mxu0 0.0
    %229 = vmatprep.subr.mxu0 0.0
    %230 = vmatpush1.msra.mxu0 0.0
    %231 = vmatprep.subr.mxu0 0.0
    %232 = vmatpush1.msra.mxu0 0.0
    %233 = vmatprep.subr.mxu0 0.0
    %234 = vmatpush1.msra.mxu0 0.0
    %235 = vmatprep.subr.mxu0 0.0
    %236 = vmatpush1.msra.mxu0 0.0
    %237 = vmatprep.subr.mxu0 0.0
    %238 = vmatpush1.msra.mxu0 0.0
    %239 = vmatprep.subr.mxu0 0.0
    %240 = vmatpush1.msra.mxu0 0.0
    %241 = vmatprep.subr.mxu0 0.0
    %242 = vmatpush1.msra.mxu0 0.0
    %243 = vmatprep.subr.mxu0 0.0
    %244 = vmatpush1.msra.mxu0 0.0
    %245 = vmatprep.subr.mxu0 0.0
    %246 = vmatpush1.msra.mxu0 0.0
    %247 = vmatprep.subr.mxu0 0.0
    %248 = vmatpush1.msra.mxu0 0.0
    %249 = vmatprep.subr.mxu0 0.0
    %250 = vmatpush1.msra.mxu0 0.0
    %251 = vmatprep.subr.mxu0 0.0
    %252 = vmatpush1.msra.mxu0 0.0
    %253 = vmatprep.subr.mxu0 0.0
    %254 = vmatpush1.msra.mxu0 0.0
    %255 = vmatprep.subr.mxu0 0.0
    %256 = vmatpush1.msra.mxu0 0.0
    %257 = vmatprep.subr.mxu0 0.0
    %258 = vmatpush1.msra.mxu0 0.0
    %259 = vmatprep.subr.mxu0 0.0
    %260 = vmatpush1.msra.mxu0 0.0
    %261 = vmatprep.subr.mxu0 0.0
    %262 = vmatpush1.msra.mxu0 0.0
    %263 = vmatprep.subr.mxu0 0.0
    %264 = vmatpush1.msra.mxu0 0.0
    %265 = vmatprep.subr.mxu0 0.0
    %266 = vmatpush1.msra.mxu0 0.0
    %267 = vmatprep.mubr.f32.mxu0 0.0
    %268 = vmatmul.mubr.f32.gmra.mrb[0].mxu0 %v192
    %v269 = vpop.f32.mrb[0].mxu0
    %v270 = vadd.f32 %v174, %v269
    %v271 = vpop.f32.mrb[0].mxu0
    %272 = vmatprep.mubr.f32.mxu0 0.0
    %273 = vmatmul.mubr.f32.gmra.mrb[0].mxu0 %v195
    %v274 = vpop.f32.mrb[0].mxu0
    %v275 = vadd.f32 %v179, %v274
    %v276 = vpop.f32.mrb[0].mxu0
    %277 = vmatprep.mubr.f32.mxu0 0.0
    %278 = vmatmul.mubr.f32.gmra.mrb[0].mxu0 %v198
    %v279 = vpop.f32.mrb[0].mxu0
    %v280 = vadd.f32 %v184, %v279
    %v281 = vpop.f32.mrb[0].mxu0
    %282 = vmatprep.mubr.f32.mxu0 0.0
    %283 = vmatmul.mubr.f32.gmra.mrb[0].mxu0 %v201
    %v284 = vpop.f32.mrb[0].mxu0
    %v285 = vadd.f32 %v189, %v284
    %v286 = vpop.f32.mrb[0].mxu0
    %287 = vdwg.mxu0
    %v288 = vmax.f32 %v270, 0.0
    %v289 = vmax.f32 %v275, 0.0
    %v290 = vmax.f32 %v280, 0.0
    %v291 = vmax.f32 %v285, 0.0
    %v292 = vld [vmem:[%s5] sm:$0xff]
    %v293 = vld [vmem:[%s5 + $0x8] sm:$0xff]
    %v294 = vld [vmem:[%s5 + $0x10] sm:$0xff]
    %v295 = vld [vmem:[%s5 + $0x18] sm:$0xff]
    %297 = vset.pattern.permute.xlu0 0
    %298 = vperm.xlu0 %297, %v292
    %v299 = vpop.permute.xlu0 %298
    %302 = vset.pattern.permute.xlu0 0
    %303 = vperm.xlu0 %302, %v293
    %v304 = vpop.permute.xlu0 %303
    %307 = vset.pattern.permute.xlu0 0
    %308 = vperm.xlu0 %307, %v294
    %v309 = vpop.permute.xlu0 %308
    %312 = vset.pattern.permute.xlu0 0
    %313 = vperm.xlu0 %312, %v295
    %v314 = vpop.permute.xlu0 %313
    %v316 = vmul.f32 %v288, %v299
    %v317 = vmul.f32 %v289, %v304
    %v318 = vmul.f32 %v290, %v309
    %v319 = vmul.f32 %v291, %v314
    %vm320 = vcmask 64512
    %v321 = vsel %vm320, %v316, 0.0
    %v322 = vsel %vm320, %v317, 0.0
    %v323 = vadd.f32 %v321, %v322
    %v324 = vsel %vm320, %v318, 0.0
    %v325 = vadd.f32 %v323, %v324
    %v326 = vsel %vm320, %v319, 0.0
    %v327 = vadd.f32 %v325, %v326
    %v328 = vrot.slane %v327, 4
    %v329 = vadd.f32 %v327, %v328
    %v330 = vrot.slane %v329, 2
    %v331 = vadd.f32 %v329, %v330
    %v332 = vrot.slane %v331, 1
    %v333 = vadd.f32 %v331, %v332
    %v334 = vld [vmem:[#allocation2] sm:$0x1]
    %336 = vset.pattern.permute.xlu0 0
    %337 = vperm.xlu0 %336, %v334
    %v338 = vpop.permute.xlu0 %337
    %v340 = vlaneseq
    %v341 = vshrl.u32 %v340, 7
    %v342 = vsub.s32 0, %v341
    %v343 = vrot.slane %v338, %v342
    %v344 = vadd.f32 %v333, %v343
    %v345 = vxor.u32 %v344, 2147483648
    %v346 = vmul.f32 %v345, 1.442695
    %v347 = vpow.pop %v346
    %v348 = vadd.f32 %v347, 1.0
    %v349 = vrcp.pop %v348
    %v350 = vmul.f32 1.0, %v349
    %vm351 = vcmask 57344
    %352 = vst.msk [vmem:[#allocation3] sm:$0x1] %vm351, %v350
    // Predicated region
    $region30: #{tpu_custom_call.1} parent=1 // pred_check
      _
    $region31: #{tpu_custom_call.1} parent=1 // pred_check_branch
      %354 = sbr.rel (0) target = $region33
    $region32: #{tpu_custom_call.1} parent=1 // pred_region
      %s356 = ssub.s32 16, 16
      %357 = vsyncadd [#allocation4], %s356
      %s359 = sshll.u32 [#allocation3], 4
      %s360 = int_to_ptr.vmem [resolvable:$true] %s359
      %362 = dma.vmem_to_hbm [thread:$0]  %s360, 16, %s7, [#allocation4]
    $region33: #{tpu_custom_call.1} parent=1 // pred_fallthru
      _
    // Predicated region
    $region34: #{tpu_custom_call.1} parent=1 // pred_check
      _
    $region35: #{tpu_custom_call.1} parent=1 // pred_check_branch
      %364 = sbr.rel (0) target = $region37
    $region36: #{tpu_custom_call.1} parent=1 // pred_region
      %365 = dma.done [#allocation4], 16
    $region37: #{tpu_custom_call.1} parent=1 // pred_fallthru
      _
    %366 = vsyncpa [#allocation4], 1

</llo_original>
